<compile_context>
chip_gen: v5e
topology: v5e:2x2
jax: 0.10.0
libtpu: 0.0.40
codegen_flags: <defaults>
</compile_context>

<pallas_src>
import jax
import jax.numpy as jnp
from jax.experimental import pallas as pl
from jax.experimental.pallas import tpu as pltpu

OUT_W = 128  # lane-dense output slab width (one full lane vreg)


# ----------------------------------------------------------------------------- kernel
def noise_model_kernel(x_ref, wih_ref, whh_ref, bg_ref, w1_ref, b1_ref,
                       wd_ref, w2_ref, bout_ref, out_ref):
    """Single invocation: hoisted all-T input projection, fused-gate LSTM
    recurrence, NoiseNet/DynamicsNet heads into one lane-dense output slab.

    x_ref:    (T*B, D_in)   flattened (timestep-major) input sequence
    wih_ref:  (D_in, 4H)    fused input weights, gate column order [i|f|g|o]
    whh_ref:  (H, 4H)       fused recurrent weights, same column order
    bg_ref:   (1, 4H)       combined gate bias (b_ih + b_hh)
    w1_ref:   (H, H), b1_ref: (1, H)   NoiseNet first Linear
    wd_ref:   (H, OUT_W)    W_dyn^T zero-padded into lanes [0:d]
    w2_ref:   (H, OUT_W)    W2^T    zero-padded into lanes [d:d+m]
    bout_ref: (1, OUT_W)    b_dyn in [0:d], b2 in [d:d+m]
    out_ref:  (B, OUT_W)    lane-dense output slab
    """
    B = out_ref.shape[0]
    TB = x_ref.shape[0]
    T = TB // B
    H = whh_ref.shape[0]

    # One MXU op covers the input projection of ALL T timesteps; the fused gate
    # bias is added here once instead of inside every unrolled step.
    x_proj = (jnp.dot(x_ref[...], wih_ref[...],
                      preferred_element_type=jnp.float32)
              + bg_ref[...])                                     # (T*B, 4H)

    whh = whh_ref[...]                                           # hoisted, (H, 4H)

    h = jnp.zeros((B, H), jnp.float32)
    c = jnp.zeros((B, H), jnp.float32)

    # Fully-unrolled recurrence over static T; h/c live in vregs.
    # One fused matmul per step -> one lane-dense (B, 4H) gate slab.
    for t in range(T):
        gates = (x_proj[t * B:(t + 1) * B, :]
                 + jnp.dot(h, whh, preferred_element_type=jnp.float32))
        i_g = jax.nn.sigmoid(gates[:, 0 * H:1 * H])
        f_g = jax.nn.sigmoid(gates[:, 1 * H:2 * H])
        g_g = jnp.tanh(gates[:, 2 * H:3 * H])
        o_g = jax.nn.sigmoid(gates[:, 3 * H:4 * H])
        c = f_g * c + i_g * g_g
        h = o_g * jnp.tanh(c)

    # Heads: 3 tiny MXU ops, single unmasked full-lane store of the (B, 128) slab.
    hh = jnp.tanh(jnp.dot(h, w1_ref[...],
                          preferred_element_type=jnp.float32) + b1_ref[...])
    out_ref[...] = (jnp.dot(h, wd_ref[...], preferred_element_type=jnp.float32)
                    + jnp.dot(hh, w2_ref[...], preferred_element_type=jnp.float32)
                    + bout_ref[...])


# ----------------------------------------------------------------------------- glue
def triangular_param_jax(vec, d, eps=1e-3):
    """Same semantics as torch triangular_param: row-major lower-tri fill,
    softplus(+eps) on the diagonal, return L @ L^T.  Tiny (d=2); plain JAX."""
    B = vec.shape[0]
    rows, cols = jnp.tril_indices(d)
    L = jnp.zeros((B, d, d), vec.dtype)
    L = L.at[:, rows, cols].set(vec)
    diag = jnp.arange(d)
    L = L.at[:, diag, diag].set(jax.nn.softplus(L[:, diag, diag]) + eps)
    return L @ jnp.swapaxes(L, -1, -2)


def pack_params(raw, out_w=OUT_W):
    """Convert PyTorch-layout weights into the kernel layout: fused (D_in,4H)/(H,4H)
    gate matrices, fused gate bias, head weights zero-padded to the lane-dense
    128-wide output slab."""
    four_h, D_in = raw["w_ih"].shape
    H = four_h // 4
    d = raw["dyn_w"].shape[0]
    m = raw["n2_w"].shape[0]
    assert d + m <= out_w
    # NoiseModel adds x_seq[:, -1] (width D_in) to dyn(h) (width d): requires D_in == d.
    assert D_in == d, "NoiseModel.forward requires input_dim == output_dim"

    f32 = jnp.float32
    # PyTorch weight_ih_l0 is (4H, D_in), row-blocks ordered [i; f; g; o];
    # transposing keeps the gate order in the column blocks.
    wih = raw["w_ih"].T.astype(f32)                               # (D_in, 4H)
    whh = raw["w_hh"].T.astype(f32)                               # (H, 4H)
    bg = (raw["b_ih"] + raw["b_hh"]).reshape(1, 4 * H).astype(f32)

    w1 = raw["n1_w"].T.astype(f32)                                # (H, H)
    b1 = raw["n1_b"].reshape(1, H).astype(f32)

    wd_pad = jnp.zeros((H, out_w), f32).at[:, :d].set(raw["dyn_w"].T)
    w2_pad = jnp.zeros((H, out_w), f32).at[:, d:d + m].set(raw["n2_w"].T)
    b_out = (jnp.zeros((1, out_w), f32)
             .at[0, :d].set(raw["dyn_b"])
             .at[0, d:d + m].set(raw["n2_b"]))

    return dict(wih=wih, whh=whh, bg=bg, w1=w1, b1=b1,
                wd_pad=wd_pad, w2_pad=w2_pad, b_out=b_out,
                H=H, d=d, m=m, out_w=out_w)


def noise_model_forward(x_seq, kp):
    B, T, D_in = x_seq.shape
    d, m, out_w = kp["d"], kp["m"], kp["out_w"]

    # Layout plumbing only: (B, T, D_in) -> (T*B, D_in) so every timestep block is a
    # contiguous leading-dim slice and the all-T input projection is a single dot.
    x_flat = jnp.transpose(x_seq, (1, 0, 2)).reshape(T * B, D_in)

    vmem = pl.BlockSpec(memory_space=pltpu.MemorySpace.VMEM)
    out_slab = pl.pallas_call(
        noise_model_kernel,
        out_shape=jax.ShapeDtypeStruct((B, out_w), jnp.float32),
        in_specs=[vmem] * 9,
        out_specs=vmem,
    )(x_flat, kp["wih"], kp["whh"], kp["bg"], kp["w1"], kp["b1"],
      kp["wd_pad"], kp["w2_pad"], kp["b_out"])

    # x_last passthrough + tiny triangular parameterization stay as wrapper glue.
    x_pred = x_seq[:, -1, :] + out_slab[:, :d]
    vec = out_slab[:, d:d + m]
    Q = triangular_param_jax(vec, d, eps=1e-3)
    return x_pred, Q


# ----------------------------------------------------------------------------- params / reference
def init_params(key, input_dim, hidden_dim, output_dim, scale=0.1):
    """Raw weights in PyTorch layouts (weight_ih_l0 etc.)."""
    H, D_in, d = hidden_dim, input_dim, output_dim
    m = d * (d + 1) // 2
    ks = jax.random.split(key, 10)
    raw = {
        "w_ih": jax.random.normal(ks[0], (4 * H, D_in)) * scale,
        "w_hh": jax.random.normal(ks[1], (4 * H, H)) * scale,
        "b_ih": jax.random.normal(ks[2], (4 * H,)) * scale,
        "b_hh": jax.random.normal(ks[3], (4 * H,)) * scale,
        "dyn_w": jax.random.normal(ks[4], (d, H)) * scale,    # nn.Linear(H, d)
        "dyn_b": jax.random.normal(ks[5], (d,)) * scale,
        "n1_w": jax.random.normal(ks[6], (H, H)) * scale,     # nn.Linear(H, H)
        "n1_b": jax.random.normal(ks[7], (H,)) * scale,
        "n2_w": jax.random.normal(ks[8], (m, H)) * scale,     # nn.Linear(H, m)
        "n2_b": jax.random.normal(ks[9], (m,)) * scale,
    }
    return {k: v.astype(jnp.float32) for k, v in raw.items()}


def noise_model_reference(x_seq, raw):
    """Pure-JAX reference with PyTorch LSTM semantics (gate order i, f, g, o)."""
    B, T, _ = x_seq.shape
    H = raw["w_ih"].shape[0] // 4
    d = raw["dyn_w"].shape[0]
    b = raw["b_ih"] + raw["b_hh"]
    h = jnp.zeros((B, H), jnp.float32)
    c = jnp.zeros((B, H), jnp.float32)
    for t in range(T):
        gates = x_seq[:, t, :] @ raw["w_ih"].T + h @ raw["w_hh"].T + b
        i_g = jax.nn.sigmoid(gates[:, 0 * H:1 * H])
        f_g = jax.nn.sigmoid(gates[:, 1 * H:2 * H])
        g_g = jnp.tanh(gates[:, 2 * H:3 * H])
        o_g = jax.nn.sigmoid(gates[:, 3 * H:4 * H])
        c = f_g * c + i_g * g_g
        h = o_g * jnp.tanh(c)
    x_pred = x_seq[:, -1, :] + h @ raw["dyn_w"].T + raw["dyn_b"]
    hh = jnp.tanh(h @ raw["n1_w"].T + raw["n1_b"])
    vec = hh @ raw["n2_w"].T + raw["n2_b"]
    return x_pred, triangular_param_jax(vec, d, eps=1e-3)


# ----------------------------------------------------------------------------- main
if __name__ == "__main__":
    B, T, D_in, H, d = 2, 8, 2, 32, 2

    key = jax.random.PRNGKey(0)
    k_x, k_p = jax.random.split(key)
    x_seq = jax.random.normal(k_x, (B, T, D_in), jnp.float32)

    raw = init_params(k_p, D_in, H, d)
    kp = pack_params(raw)

    x_pred, Q = noise_model_forward(x_seq, kp)
    jax.block_until_ready((x_pred, Q))

    assert x_pred.shape == (B, d)
    assert Q.shape == (B, d, d)

    # Cross-check against the pure-JAX reference.
    x_pred_ref, Q_ref = noise_model_reference(x_seq, raw)
    assert jnp.allclose(x_pred, x_pred_ref, atol=1e-3, rtol=1e-3)
    assert jnp.allclose(Q, Q_ref, atol=1e-3, rtol=1e-3)

    print("KERNEL_OK")
</pallas_src>

<mosaic_0001>
module attributes {stable_mosaic.version = 11 : i64} {
  func.func @noise_model_kernel(%arg0: memref<16x2xf32, #tpu.memory_space<vmem>>, %arg1: memref<2x128xf32, #tpu.memory_space<vmem>>, %arg2: memref<32x128xf32, #tpu.memory_space<vmem>>, %arg3: memref<1x128xf32, #tpu.memory_space<vmem>>, %arg4: memref<32x32xf32, #tpu.memory_space<vmem>>, %arg5: memref<1x32xf32, #tpu.memory_space<vmem>>, %arg6: memref<32x128xf32, #tpu.memory_space<vmem>>, %arg7: memref<32x128xf32, #tpu.memory_space<vmem>>, %arg8: memref<1x128xf32, #tpu.memory_space<vmem>>, %arg9: memref<2x128xf32, #tpu.memory_space<vmem>>) attributes {dimension_semantics = [], scalar_prefetch = 0 : i64, scratch_operands = 0 : i64, tpu.core_type = #tpu.core_type<tc>} {
    %c0 = arith.constant 0 : index
    %c0_0 = arith.constant 0 : index
    %0 = vector.load %arg0[%c0, %c0_0] : memref<16x2xf32, #tpu.memory_space<vmem>>, vector<16x2xf32>
    %c0_1 = arith.constant 0 : index
    %c0_2 = arith.constant 0 : index
    %1 = vector.load %arg1[%c0_1, %c0_2] : memref<2x128xf32, #tpu.memory_space<vmem>>, vector<2x128xf32>
    %cst = arith.constant dense<0.000000e+00> : vector<16x128xf32>
    %2 = tpu.matmul %0, %1, %cst {dimension_numbers = #tpu.dot_dimension_numbers<[1], [0], [0], [1], [0, 0, 1, 1], [], []>} : vector<16x2xf32>, vector<2x128xf32>, vector<16x128xf32> -> vector<16x128xf32>
    %c0_3 = arith.constant 0 : index
    %c0_4 = arith.constant 0 : index
    %3 = vector.load %arg3[%c0_3, %c0_4] : memref<1x128xf32, #tpu.memory_space<vmem>>, vector<1x128xf32>
    %4 = vector.broadcast %3 : vector<1x128xf32> to vector<16x128xf32>
    %5 = arith.addf %2, %4 : vector<16x128xf32>
    %c0_5 = arith.constant 0 : index
    %c0_6 = arith.constant 0 : index
    %6 = vector.load %arg2[%c0_5, %c0_6] : memref<32x128xf32, #tpu.memory_space<vmem>>, vector<32x128xf32>
    %cst_7 = arith.constant 0.000000e+00 : f32
    %7 = vector.broadcast %cst_7 : f32 to vector<2x32xf32>
    %cst_8 = arith.constant 0.000000e+00 : f32
    %8 = vector.broadcast %cst_8 : f32 to vector<2x32xf32>
    %9 = vector.extract_strided_slice %5 {offsets = [0, 0], sizes = [2, 128], strides = [1, 1]} : vector<16x128xf32> to vector<2x128xf32>
    %cst_9 = arith.constant dense<0.000000e+00> : vector<2x128xf32>
    %10 = tpu.matmul %7, %6, %cst_9 {dimension_numbers = #tpu.dot_dimension_numbers<[1], [0], [0], [1], [0, 0, 1, 1], [], []>} : vector<2x32xf32>, vector<32x128xf32>, vector<2x128xf32> -> vector<2x128xf32>
    %11 = arith.addf %9, %10 : vector<2x128xf32>
    %12 = vector.extract_strided_slice %11 {offsets = [0, 0], sizes = [2, 32], strides = [1, 1]} : vector<2x128xf32> to vector<2x32xf32>
    %13 = arith.negf %12 : vector<2x32xf32>
    %14 = math.exp %13 : vector<2x32xf32>
    %cst_10 = arith.constant 1.000000e+00 : f32
    %15 = vector.broadcast %cst_10 : f32 to vector<2x32xf32>
    %16 = arith.addf %15, %14 : vector<2x32xf32>
    %17 = arith.divf %15, %16 : vector<2x32xf32>
    %18 = vector.extract_strided_slice %11 {offsets = [0, 32], sizes = [2, 32], strides = [1, 1]} : vector<2x128xf32> to vector<2x32xf32>
    %19 = arith.negf %18 : vector<2x32xf32>
    %20 = math.exp %19 : vector<2x32xf32>
    %cst_11 = arith.constant 1.000000e+00 : f32
    %21 = vector.broadcast %cst_11 : f32 to vector<2x32xf32>
    %22 = arith.addf %21, %20 : vector<2x32xf32>
    %23 = arith.divf %21, %22 : vector<2x32xf32>
    %24 = vector.extract_strided_slice %11 {offsets = [0, 64], sizes = [2, 32], strides = [1, 1]} : vector<2x128xf32> to vector<2x32xf32>
    %25 = math.tanh %24 : vector<2x32xf32>
    %26 = vector.extract_strided_slice %11 {offsets = [0, 96], sizes = [2, 32], strides = [1, 1]} : vector<2x128xf32> to vector<2x32xf32>
    %27 = arith.negf %26 : vector<2x32xf32>
    %28 = math.exp %27 : vector<2x32xf32>
    %cst_12 = arith.constant 1.000000e+00 : f32
    %29 = vector.broadcast %cst_12 : f32 to vector<2x32xf32>
    %30 = arith.addf %29, %28 : vector<2x32xf32>
    %31 = arith.divf %29, %30 : vector<2x32xf32>
    %32 = arith.mulf %23, %8 : vector<2x32xf32>
    %33 = arith.mulf %17, %25 : vector<2x32xf32>
    %34 = arith.addf %32, %33 : vector<2x32xf32>
    %35 = math.tanh %34 : vector<2x32xf32>
    %36 = arith.mulf %31, %35 : vector<2x32xf32>
    %37 = vector.extract_strided_slice %5 {offsets = [2, 0], sizes = [2, 128], strides = [1, 1]} : vector<16x128xf32> to vector<2x128xf32>
    %cst_13 = arith.constant dense<0.000000e+00> : vector<2x128xf32>
    %38 = tpu.matmul %36, %6, %cst_13 {dimension_numbers = #tpu.dot_dimension_numbers<[1], [0], [0], [1], [0, 0, 1, 1], [], []>} : vector<2x32xf32>, vector<32x128xf32>, vector<2x128xf32> -> vector<2x128xf32>
    %39 = arith.addf %37, %38 : vector<2x128xf32>
    %40 = vector.extract_strided_slice %39 {offsets = [0, 0], sizes = [2, 32], strides = [1, 1]} : vector<2x128xf32> to vector<2x32xf32>
    %41 = arith.negf %40 : vector<2x32xf32>
    %42 = math.exp %41 : vector<2x32xf32>
    %cst_14 = arith.constant 1.000000e+00 : f32
    %43 = vector.broadcast %cst_14 : f32 to vector<2x32xf32>
    %44 = arith.addf %43, %42 : vector<2x32xf32>
    %45 = arith.divf %43, %44 : vector<2x32xf32>
    %46 = vector.extract_strided_slice %39 {offsets = [0, 32], sizes = [2, 32], strides = [1, 1]} : vector<2x128xf32> to vector<2x32xf32>
    %47 = arith.negf %46 : vector<2x32xf32>
    %48 = math.exp %47 : vector<2x32xf32>
    %cst_15 = arith.constant 1.000000e+00 : f32
    %49 = vector.broadcast %cst_15 : f32 to vector<2x32xf32>
    %50 = arith.addf %49, %48 : vector<2x32xf32>
    %51 = arith.divf %49, %50 : vector<2x32xf32>
    %52 = vector.extract_strided_slice %39 {offsets = [0, 64], sizes = [2, 32], strides = [1, 1]} : vector<2x128xf32> to vector<2x32xf32>
    %53 = math.tanh %52 : vector<2x32xf32>
    %54 = vector.extract_strided_slice %39 {offsets = [0, 96], sizes = [2, 32], strides = [1, 1]} : vector<2x128xf32> to vector<2x32xf32>
    %55 = arith.negf %54 : vector<2x32xf32>
    %56 = math.exp %55 : vector<2x32xf32>
    %cst_16 = arith.constant 1.000000e+00 : f32
    %57 = vector.broadcast %cst_16 : f32 to vector<2x32xf32>
    %58 = arith.addf %57, %56 : vector<2x32xf32>
    %59 = arith.divf %57, %58 : vector<2x32xf32>
    %60 = arith.mulf %51, %34 : vector<2x32xf32>
    %61 = arith.mulf %45, %53 : vector<2x32xf32>
    %62 = arith.addf %60, %61 : vector<2x32xf32>
    %63 = math.tanh %62 : vector<2x32xf32>
    %64 = arith.mulf %59, %63 : vector<2x32xf32>
    %65 = vector.extract_strided_slice %5 {offsets = [4, 0], sizes = [2, 128], strides = [1, 1]} : vector<16x128xf32> to vector<2x128xf32>
    %cst_17 = arith.constant dense<0.000000e+00> : vector<2x128xf32>
    %66 = tpu.matmul %64, %6, %cst_17 {dimension_numbers = #tpu.dot_dimension_numbers<[1], [0], [0], [1], [0, 0, 1, 1], [], []>} : vector<2x32xf32>, vector<32x128xf32>, vector<2x128xf32> -> vector<2x128xf32>
    %67 = arith.addf %65, %66 : vector<2x128xf32>
    %68 = vector.extract_strided_slice %67 {offsets = [0, 0], sizes = [2, 32], strides = [1, 1]} : vector<2x128xf32> to vector<2x32xf32>
    %69 = arith.negf %68 : vector<2x32xf32>
    %70 = math.exp %69 : vector<2x32xf32>
    %cst_18 = arith.constant 1.000000e+00 : f32
    %71 = vector.broadcast %cst_18 : f32 to vector<2x32xf32>
    %72 = arith.addf %71, %70 : vector<2x32xf32>
    %73 = arith.divf %71, %72 : vector<2x32xf32>
    %74 = vector.extract_strided_slice %67 {offsets = [0, 32], sizes = [2, 32], strides = [1, 1]} : vector<2x128xf32> to vector<2x32xf32>
    %75 = arith.negf %74 : vector<2x32xf32>
    %76 = math.exp %75 : vector<2x32xf32>
    %cst_19 = arith.constant 1.000000e+00 : f32
    %77 = vector.broadcast %cst_19 : f32 to vector<2x32xf32>
    %78 = arith.addf %77, %76 : vector<2x32xf32>
    %79 = arith.divf %77, %78 : vector<2x32xf32>
    %80 = vector.extract_strided_slice %67 {offsets = [0, 64], sizes = [2, 32], strides = [1, 1]} : vector<2x128xf32> to vector<2x32xf32>
    %81 = math.tanh %80 : vector<2x32xf32>
    %82 = vector.extract_strided_slice %67 {offsets = [0, 96], sizes = [2, 32], strides = [1, 1]} : vector<2x128xf32> to vector<2x32xf32>
    %83 = arith.negf %82 : vector<2x32xf32>
    %84 = math.exp %83 : vector<2x32xf32>
    %cst_20 = arith.constant 1.000000e+00 : f32
    %85 = vector.broadcast %cst_20 : f32 to vector<2x32xf32>
    %86 = arith.addf %85, %84 : vector<2x32xf32>
    %87 = arith.divf %85, %86 : vector<2x32xf32>
    %88 = arith.mulf %79, %62 : vector<2x32xf32>
    %89 = arith.mulf %73, %81 : vector<2x32xf32>
    %90 = arith.addf %88, %89 : vector<2x32xf32>
    %91 = math.tanh %90 : vector<2x32xf32>
    %92 = arith.mulf %87, %91 : vector<2x32xf32>
    %93 = vector.extract_strided_slice %5 {offsets = [6, 0], sizes = [2, 128], strides = [1, 1]} : vector<16x128xf32> to vector<2x128xf32>
    %cst_21 = arith.constant dense<0.000000e+00> : vector<2x128xf32>
    %94 = tpu.matmul %92, %6, %cst_21 {dimension_numbers = #tpu.dot_dimension_numbers<[1], [0], [0], [1], [0, 0, 1, 1], [], []>} : vector<2x32xf32>, vector<32x128xf32>, vector<2x128xf32> -> vector<2x128xf32>
    %95 = arith.addf %93, %94 : vector<2x128xf32>
    %96 = vector.extract_strided_slice %95 {offsets = [0, 0], sizes = [2, 32], strides = [1, 1]} : vector<2x128xf32> to vector<2x32xf32>
    %97 = arith.negf %96 : vector<2x32xf32>
    %98 = math.exp %97 : vector<2x32xf32>
    %cst_22 = arith.constant 1.000000e+00 : f32
    %99 = vector.broadcast %cst_22 : f32 to vector<2x32xf32>
    %100 = arith.addf %99, %98 : vector<2x32xf32>
    %101 = arith.divf %99, %100 : vector<2x32xf32>
    %102 = vector.extract_strided_slice %95 {offsets = [0, 32], sizes = [2, 32], strides = [1, 1]} : vector<2x128xf32> to vector<2x32xf32>
    %103 = arith.negf %102 : vector<2x32xf32>
    %104 = math.exp %103 : vector<2x32xf32>
    %cst_23 = arith.constant 1.000000e+00 : f32
    %105 = vector.broadcast %cst_23 : f32 to vector<2x32xf32>
    %106 = arith.addf %105, %104 : vector<2x32xf32>
    %107 = arith.divf %105, %106 : vector<2x32xf32>
    %108 = vector.extract_strided_slice %95 {offsets = [0, 64], sizes = [2, 32], strides = [1, 1]} : vector<2x128xf32> to vector<2x32xf32>
    %109 = math.tanh %108 : vector<2x32xf32>
    %110 = vector.extract_strided_slice %95 {offsets = [0, 96], sizes = [2, 32], strides = [1, 1]} : vector<2x128xf32> to vector<2x32xf32>
    %111 = arith.negf %110 : vector<2x32xf32>
    %112 = math.exp %111 : vector<2x32xf32>
    %cst_24 = arith.constant 1.000000e+00 : f32
    %113 = vector.broadcast %cst_24 : f32 to vector<2x32xf32>
    %114 = arith.addf %113, %112 : vector<2x32xf32>
    %115 = arith.divf %113, %114 : vector<2x32xf32>
    %116 = arith.mulf %107, %90 : vector<2x32xf32>
    %117 = arith.mulf %101, %109 : vector<2x32xf32>
    %118 = arith.addf %116, %117 : vector<2x32xf32>
    %119 = math.tanh %118 : vector<2x32xf32>
    %120 = arith.mulf %115, %119 : vector<2x32xf32>
    %121 = vector.extract_strided_slice %5 {offsets = [8, 0], sizes = [2, 128], strides = [1, 1]} : vector<16x128xf32> to vector<2x128xf32>
    %cst_25 = arith.constant dense<0.000000e+00> : vector<2x128xf32>
    %122 = tpu.matmul %120, %6, %cst_25 {dimension_numbers = #tpu.dot_dimension_numbers<[1], [0], [0], [1], [0, 0, 1, 1], [], []>} : vector<2x32xf32>, vector<32x128xf32>, vector<2x128xf32> -> vector<2x128xf32>
    %123 = arith.addf %121, %122 : vector<2x128xf32>
    %124 = vector.extract_strided_slice %123 {offsets = [0, 0], sizes = [2, 32], strides = [1, 1]} : vector<2x128xf32> to vector<2x32xf32>
    %125 = arith.negf %124 : vector<2x32xf32>
    %126 = math.exp %125 : vector<2x32xf32>
    %cst_26 = arith.constant 1.000000e+00 : f32
    %127 = vector.broadcast %cst_26 : f32 to vector<2x32xf32>
    %128 = arith.addf %127, %126 : vector<2x32xf32>
    %129 = arith.divf %127, %128 : vector<2x32xf32>
    %130 = vector.extract_strided_slice %123 {offsets = [0, 32], sizes = [2, 32], strides = [1, 1]} : vector<2x128xf32> to vector<2x32xf32>
    %131 = arith.negf %130 : vector<2x32xf32>
    %132 = math.exp %131 : vector<2x32xf32>
    %cst_27 = arith.constant 1.000000e+00 : f32
    %133 = vector.broadcast %cst_27 : f32 to vector<2x32xf32>
    %134 = arith.addf %133, %132 : vector<2x32xf32>
    %135 = arith.divf %133, %134 : vector<2x32xf32>
    %136 = vector.extract_strided_slice %123 {offsets = [0, 64], sizes = [2, 32], strides = [1, 1]} : vector<2x128xf32> to vector<2x32xf32>
    %137 = math.tanh %136 : vector<2x32xf32>
    %138 = vector.extract_strided_slice %123 {offsets = [0, 96], sizes = [2, 32], strides = [1, 1]} : vector<2x128xf32> to vector<2x32xf32>
    %139 = arith.negf %138 : vector<2x32xf32>
    %140 = math.exp %139 : vector<2x32xf32>
    %cst_28 = arith.constant 1.000000e+00 : f32
    %141 = vector.broadcast %cst_28 : f32 to vector<2x32xf32>
    %142 = arith.addf %141, %140 : vector<2x32xf32>
    %143 = arith.divf %141, %142 : vector<2x32xf32>
    %144 = arith.mulf %135, %118 : vector<2x32xf32>
    %145 = arith.mulf %129, %137 : vector<2x32xf32>
    %146 = arith.addf %144, %145 : vector<2x32xf32>
    %147 = math.tanh %146 : vector<2x32xf32>
    %148 = arith.mulf %143, %147 : vector<2x32xf32>
    %149 = vector.extract_strided_slice %5 {offsets = [10, 0], sizes = [2, 128], strides = [1, 1]} : vector<16x128xf32> to vector<2x128xf32>
    %cst_29 = arith.constant dense<0.000000e+00> : vector<2x128xf32>
    %150 = tpu.matmul %148, %6, %cst_29 {dimension_numbers = #tpu.dot_dimension_numbers<[1], [0], [0], [1], [0, 0, 1, 1], [], []>} : vector<2x32xf32>, vector<32x128xf32>, vector<2x128xf32> -> vector<2x128xf32>
    %151 = arith.addf %149, %150 : vector<2x128xf32>
    %152 = vector.extract_strided_slice %151 {offsets = [0, 0], sizes = [2, 32], strides = [1, 1]} : vector<2x128xf32> to vector<2x32xf32>
    %153 = arith.negf %152 : vector<2x32xf32>
    %154 = math.exp %153 : vector<2x32xf32>
    %cst_30 = arith.constant 1.000000e+00 : f32
    %155 = vector.broadcast %cst_30 : f32 to vector<2x32xf32>
    %156 = arith.addf %155, %154 : vector<2x32xf32>
    %157 = arith.divf %155, %156 : vector<2x32xf32>
    %158 = vector.extract_strided_slice %151 {offsets = [0, 32], sizes = [2, 32], strides = [1, 1]} : vector<2x128xf32> to vector<2x32xf32>
    %159 = arith.negf %158 : vector<2x32xf32>
    %160 = math.exp %159 : vector<2x32xf32>
    %cst_31 = arith.constant 1.000000e+00 : f32
    %161 = vector.broadcast %cst_31 : f32 to vector<2x32xf32>
    %162 = arith.addf %161, %160 : vector<2x32xf32>
    %163 = arith.divf %161, %162 : vector<2x32xf32>
    %164 = vector.extract_strided_slice %151 {offsets = [0, 64], sizes = [2, 32], strides = [1, 1]} : vector<2x128xf32> to vector<2x32xf32>
    %165 = math.tanh %164 : vector<2x32xf32>
    %166 = vector.extract_strided_slice %151 {offsets = [0, 96], sizes = [2, 32], strides = [1, 1]} : vector<2x128xf32> to vector<2x32xf32>
    %167 = arith.negf %166 : vector<2x32xf32>
    %168 = math.exp %167 : vector<2x32xf32>
    %cst_32 = arith.constant 1.000000e+00 : f32
    %169 = vector.broadcast %cst_32 : f32 to vector<2x32xf32>
    %170 = arith.addf %169, %168 : vector<2x32xf32>
    %171 = arith.divf %169, %170 : vector<2x32xf32>
    %172 = arith.mulf %163, %146 : vector<2x32xf32>
    %173 = arith.mulf %157, %165 : vector<2x32xf32>
    %174 = arith.addf %172, %173 : vector<2x32xf32>
    %175 = math.tanh %174 : vector<2x32xf32>
    %176 = arith.mulf %171, %175 : vector<2x32xf32>
    %177 = vector.extract_strided_slice %5 {offsets = [12, 0], sizes = [2, 128], strides = [1, 1]} : vector<16x128xf32> to vector<2x128xf32>
    %cst_33 = arith.constant dense<0.000000e+00> : vector<2x128xf32>
    %178 = tpu.matmul %176, %6, %cst_33 {dimension_numbers = #tpu.dot_dimension_numbers<[1], [0], [0], [1], [0, 0, 1, 1], [], []>} : vector<2x32xf32>, vector<32x128xf32>, vector<2x128xf32> -> vector<2x128xf32>
    %179 = arith.addf %177, %178 : vector<2x128xf32>
    %180 = vector.extract_strided_slice %179 {offsets = [0, 0], sizes = [2, 32], strides = [1, 1]} : vector<2x128xf32> to vector<2x32xf32>
    %181 = arith.negf %180 : vector<2x32xf32>
    %182 = math.exp %181 : vector<2x32xf32>
    %cst_34 = arith.constant 1.000000e+00 : f32
    %183 = vector.broadcast %cst_34 : f32 to vector<2x32xf32>
    %184 = arith.addf %183, %182 : vector<2x32xf32>
    %185 = arith.divf %183, %184 : vector<2x32xf32>
    %186 = vector.extract_strided_slice %179 {offsets = [0, 32], sizes = [2, 32], strides = [1, 1]} : vector<2x128xf32> to vector<2x32xf32>
    %187 = arith.negf %186 : vector<2x32xf32>
    %188 = math.exp %187 : vector<2x32xf32>
    %cst_35 = arith.constant 1.000000e+00 : f32
    %189 = vector.broadcast %cst_35 : f32 to vector<2x32xf32>
    %190 = arith.addf %189, %188 : vector<2x32xf32>
    %191 = arith.divf %189, %190 : vector<2x32xf32>
    %192 = vector.extract_strided_slice %179 {offsets = [0, 64], sizes = [2, 32], strides = [1, 1]} : vector<2x128xf32> to vector<2x32xf32>
    %193 = math.tanh %192 : vector<2x32xf32>
    %194 = vector.extract_strided_slice %179 {offsets = [0, 96], sizes = [2, 32], strides = [1, 1]} : vector<2x128xf32> to vector<2x32xf32>
    %195 = arith.negf %194 : vector<2x32xf32>
    %196 = math.exp %195 : vector<2x32xf32>
    %cst_36 = arith.constant 1.000000e+00 : f32
    %197 = vector.broadcast %cst_36 : f32 to vector<2x32xf32>
    %198 = arith.addf %197, %196 : vector<2x32xf32>
    %199 = arith.divf %197, %198 : vector<2x32xf32>
    %200 = arith.mulf %191, %174 : vector<2x32xf32>
    %201 = arith.mulf %185, %193 : vector<2x32xf32>
    %202 = arith.addf %200, %201 : vector<2x32xf32>
    %203 = math.tanh %202 : vector<2x32xf32>
    %204 = arith.mulf %199, %203 : vector<2x32xf32>
    %205 = vector.extract_strided_slice %5 {offsets = [14, 0], sizes = [2, 128], strides = [1, 1]} : vector<16x128xf32> to vector<2x128xf32>
    %cst_37 = arith.constant dense<0.000000e+00> : vector<2x128xf32>
    %206 = tpu.matmul %204, %6, %cst_37 {dimension_numbers = #tpu.dot_dimension_numbers<[1], [0], [0], [1], [0, 0, 1, 1], [], []>} : vector<2x32xf32>, vector<32x128xf32>, vector<2x128xf32> -> vector<2x128xf32>
    %207 = arith.addf %205, %206 : vector<2x128xf32>
    %208 = vector.extract_strided_slice %207 {offsets = [0, 0], sizes = [2, 32], strides = [1, 1]} : vector<2x128xf32> to vector<2x32xf32>
    %209 = arith.negf %208 : vector<2x32xf32>
    %210 = math.exp %209 : vector<2x32xf32>
    %cst_38 = arith.constant 1.000000e+00 : f32
    %211 = vector.broadcast %cst_38 : f32 to vector<2x32xf32>
    %212 = arith.addf %211, %210 : vector<2x32xf32>
    %213 = arith.divf %211, %212 : vector<2x32xf32>
    %214 = vector.extract_strided_slice %207 {offsets = [0, 32], sizes = [2, 32], strides = [1, 1]} : vector<2x128xf32> to vector<2x32xf32>
    %215 = arith.negf %214 : vector<2x32xf32>
    %216 = math.exp %215 : vector<2x32xf32>
    %cst_39 = arith.constant 1.000000e+00 : f32
    %217 = vector.broadcast %cst_39 : f32 to vector<2x32xf32>
    %218 = arith.addf %217, %216 : vector<2x32xf32>
    %219 = arith.divf %217, %218 : vector<2x32xf32>
    %220 = vector.extract_strided_slice %207 {offsets = [0, 64], sizes = [2, 32], strides = [1, 1]} : vector<2x128xf32> to vector<2x32xf32>
    %221 = math.tanh %220 : vector<2x32xf32>
    %222 = vector.extract_strided_slice %207 {offsets = [0, 96], sizes = [2, 32], strides = [1, 1]} : vector<2x128xf32> to vector<2x32xf32>
    %223 = arith.negf %222 : vector<2x32xf32>
    %224 = math.exp %223 : vector<2x32xf32>
    %cst_40 = arith.constant 1.000000e+00 : f32
    %225 = vector.broadcast %cst_40 : f32 to vector<2x32xf32>
    %226 = arith.addf %225, %224 : vector<2x32xf32>
    %227 = arith.divf %225, %226 : vector<2x32xf32>
    %228 = arith.mulf %219, %202 : vector<2x32xf32>
    %229 = arith.mulf %213, %221 : vector<2x32xf32>
    %230 = arith.addf %228, %229 : vector<2x32xf32>
    %231 = math.tanh %230 : vector<2x32xf32>
    %232 = arith.mulf %227, %231 : vector<2x32xf32>
    %c0_41 = arith.constant 0 : index
    %c0_42 = arith.constant 0 : index
    %233 = vector.load %arg4[%c0_41, %c0_42] : memref<32x32xf32, #tpu.memory_space<vmem>>, vector<32x32xf32>
    %cst_43 = arith.constant dense<0.000000e+00> : vector<2x32xf32>
    %234 = tpu.matmul %232, %233, %cst_43 {dimension_numbers = #tpu.dot_dimension_numbers<[1], [0], [0], [1], [0, 0, 1, 1], [], []>} : vector<2x32xf32>, vector<32x32xf32>, vector<2x32xf32> -> vector<2x32xf32>
    %c0_44 = arith.constant 0 : index
    %c0_45 = arith.constant 0 : index
    %235 = vector.load %arg5[%c0_44, %c0_45] : memref<1x32xf32, #tpu.memory_space<vmem>>, vector<1x32xf32>
    %236 = vector.broadcast %235 : vector<1x32xf32> to vector<2x32xf32>
    %237 = arith.addf %234, %236 : vector<2x32xf32>
    %238 = math.tanh %237 : vector<2x32xf32>
    %c0_46 = arith.constant 0 : index
    %c0_47 = arith.constant 0 : index
    %239 = vector.load %arg6[%c0_46, %c0_47] : memref<32x128xf32, #tpu.memory_space<vmem>>, vector<32x128xf32>
    %cst_48 = arith.constant dense<0.000000e+00> : vector<2x128xf32>
    %240 = tpu.matmul %232, %239, %cst_48 {dimension_numbers = #tpu.dot_dimension_numbers<[1], [0], [0], [1], [0, 0, 1, 1], [], []>} : vector<2x32xf32>, vector<32x128xf32>, vector<2x128xf32> -> vector<2x128xf32>
    %c0_49 = arith.constant 0 : index
    %c0_50 = arith.constant 0 : index
    %241 = vector.load %arg7[%c0_49, %c0_50] : memref<32x128xf32, #tpu.memory_space<vmem>>, vector<32x128xf32>
    %cst_51 = arith.constant dense<0.000000e+00> : vector<2x128xf32>
    %242 = tpu.matmul %238, %241, %cst_51 {dimension_numbers = #tpu.dot_dimension_numbers<[1], [0], [0], [1], [0, 0, 1, 1], [], []>} : vector<2x32xf32>, vector<32x128xf32>, vector<2x128xf32> -> vector<2x128xf32>
    %243 = arith.addf %240, %242 : vector<2x128xf32>
    %c0_52 = arith.constant 0 : index
    %c0_53 = arith.constant 0 : index
    %244 = vector.load %arg8[%c0_52, %c0_53] : memref<1x128xf32, #tpu.memory_space<vmem>>, vector<1x128xf32>
    %245 = vector.broadcast %244 : vector<1x128xf32> to vector<2x128xf32>
    %246 = arith.addf %243, %245 : vector<2x128xf32>
    %c0_54 = arith.constant 0 : index
    %c0_55 = arith.constant 0 : index
    %247 = vector.load %arg9[%c0_54, %c0_55] : memref<2x128xf32, #tpu.memory_space<vmem>>, vector<2x128xf32>
    tpu.vector_store %arg9[%c0_54, %c0_55], %246 {strides = array<i32>} : memref<2x128xf32, #tpu.memory_space<vmem>>, vector<2x128xf32>,
    return
  }
}

</mosaic_0001>

<llo_original>
// kernel: tpu_custom_call.1
$region0: #{tpu_custom_call.1}
  #allocation0 [shape = 'u32[]', space=smem, size = 0x4, offset = 0x4, fixed_abs, tag = 'smem constant byte address 0x4 - core index']
  #allocation1 [shape = 'u32[72,128]{1,0:T(1,128)}', space=vmem, size = 0x9000, scoped, tag = 'internal scratch']
  %s0 = inlined_call_operand.vmem [shape: f32[16,2], index: 0, kind: input, shape index: {}]
  %s1 = inlined_call_operand.vmem [shape: f32[2,128], index: 1, kind: input, shape index: {}]
  %s2 = inlined_call_operand.hbm [shape: f32[32,128], index: 2, kind: input, shape index: {}]
  %s3 = inlined_call_operand.vmem [shape: f32[1,128], index: 3, kind: input, shape index: {}]
  %s4 = inlined_call_operand.hbm [shape: f32[32,32], index: 4, kind: input, shape index: {}]
  %s5 = inlined_call_operand.vmem [shape: f32[1,32], index: 5, kind: input, shape index: {}]
  %s6 = inlined_call_operand.hbm [shape: f32[32,128], index: 6, kind: input, shape index: {}]
  %s7 = inlined_call_operand.hbm [shape: f32[32,128], index: 7, kind: input, shape index: {}]
  %s8 = inlined_call_operand.vmem [shape: f32[1,128], index: 8, kind: input, shape index: {}]
  %s9 = inlined_call_operand.hbm [shape: f32[2,128], index: 9, kind: output, shape index: {}]
  %s10 = sld [smem:[#allocation0]]
  $region62: #{tpu_custom_call.1} parent=0
    _
  %s12 = ssub.s32 1, %s10
  %s13 = scalar_select 0, %s12, %s10
  $region1: #{tpu_custom_call.1} parent=0
    #allocation2 [shape = 'u8[16384]{0}', space=vmem, size = 0x4000, scoped, tag = 'input window, operand 2, single buffered']
    #allocation3 [shape = 's32[1]{0}', space=sflag, size = 0x4, scoped, tag = 'scoped memory for tpu_custom_call.1']
    #allocation4 [shape = 's32[1]{0}', space=sflag, size = 0x4, scoped, tag = 'scoped memory for tpu_custom_call.1']
    #allocation5 [shape = 'u8[16384]{0}', space=vmem, size = 0x4000, scoped, tag = 'input window, operand 4, single buffered']
    #allocation6 [shape = 's32[1]{0}', space=sflag, size = 0x4, scoped, tag = 'scoped memory for tpu_custom_call.1']
    #allocation7 [shape = 'u8[16384]{0}', space=vmem, size = 0x4000, scoped, tag = 'input window, operand 6, single buffered']
    #allocation8 [shape = 'u8[16384]{0}', space=vmem, size = 0x4000, scoped, tag = 'input window, operand 7, single buffered']
    #allocation9 [shape = 's32[1]{0}', space=sflag, size = 0x4, scoped, tag = 'scoped memory for tpu_custom_call.1']
    #allocation10 [shape = 'u8[1024]{0}', space=vmem, size = 0x400, scoped, tag = 'output window, operand 0, single buffered']
    %14 = vsyncpa [#allocation3], 0
    %15 = vsyncpa [#allocation6], 0
    %16 = vsyncpa [#allocation9], 0
    %17 = vsyncpa [#allocation4], 0
    // Predicated region
    $region2: #{tpu_custom_call.1} parent=1 // pred_check
      _
    $region3: #{tpu_custom_call.1} parent=1 // pred_check_branch
      %19 = sbr.rel (0) target = $region5
    $region4: #{tpu_custom_call.1} parent=1 // pred_region
      _
    $region5: #{tpu_custom_call.1} parent=1 // pred_fallthru
      _
    // Predicated region
    $region6: #{tpu_custom_call.1} parent=1 // pred_check
      _
    $region7: #{tpu_custom_call.1} parent=1 // pred_check_branch
      %21 = sbr.rel (0) target = $region9
    $region8: #{tpu_custom_call.1} parent=1 // pred_region
      _
    $region9: #{tpu_custom_call.1} parent=1 // pred_fallthru
      _
    // Predicated region
    $region10: #{tpu_custom_call.1} parent=1 // pred_check
      _
    $region11: #{tpu_custom_call.1} parent=1 // pred_check_branch
      %23 = sbr.rel (0) target = $region13
    $region12: #{tpu_custom_call.1} parent=1 // pred_region
      %25 = vsyncadd [#allocation3], 0
      %s26 = sshll.u32 %s2, 4
      %s27 = int_to_ptr.hbm [resolvable:$true] %s26
      %s28 = sshll.u32 [#allocation2], 4
      %s29 = int_to_ptr.vmem [resolvable:$true] %s28
      %34 = dma.hbm_to_vmem [thread:$0]  %s27, 512, %s29, [#allocation3], 128, 128, 8
    $region13: #{tpu_custom_call.1} parent=1 // pred_fallthru
      _
    // Predicated region
    $region14: #{tpu_custom_call.1} parent=1 // pred_check
      _
    $region15: #{tpu_custom_call.1} parent=1 // pred_check_branch
      %36 = sbr.rel (0) target = $region17
    $region16: #{tpu_custom_call.1} parent=1 // pred_region
      _
    $region17: #{tpu_custom_call.1} parent=1 // pred_fallthru
      _
    // Predicated region
    $region18: #{tpu_custom_call.1} parent=1 // pred_check
      _
    $region19: #{tpu_custom_call.1} parent=1 // pred_check_branch
      %38 = sbr.rel (0) target = $region21
    $region20: #{tpu_custom_call.1} parent=1 // pred_region
      %40 = vsyncadd [#allocation6], 0
      %s41 = sshll.u32 %s4, 4
      %s42 = int_to_ptr.hbm [resolvable:$true] %s41
      %s43 = sshll.u32 [#allocation5], 4
      %s44 = int_to_ptr.vmem [resolvable:$true] %s43
      %49 = dma.hbm_to_vmem [thread:$0]  %s42, 512, %s44, [#allocation6], 128, 128, 8
    $region21: #{tpu_custom_call.1} parent=1 // pred_fallthru
      _
    // Predicated region
    $region22: #{tpu_custom_call.1} parent=1 // pred_check
      _
    $region23: #{tpu_custom_call.1} parent=1 // pred_check_branch
      %51 = sbr.rel (0) target = $region25
    $region24: #{tpu_custom_call.1} parent=1 // pred_region
      _
    $region25: #{tpu_custom_call.1} parent=1 // pred_fallthru
      _
    // Predicated region
    $region26: #{tpu_custom_call.1} parent=1 // pred_check
      _
    $region27: #{tpu_custom_call.1} parent=1 // pred_check_branch
      %53 = sbr.rel (0) target = $region29
    $region28: #{tpu_custom_call.1} parent=1 // pred_region
      %55 = vsyncadd [#allocation6], 0
      %s56 = sshll.u32 %s6, 4
      %s57 = int_to_ptr.hbm [resolvable:$true] %s56
      %s58 = sshll.u32 [#allocation7], 4
      %s59 = int_to_ptr.vmem [resolvable:$true] %s58
      %64 = dma.hbm_to_vmem [thread:$0]  %s57, 512, %s59, [#allocation6], 128, 128, 8
    $region29: #{tpu_custom_call.1} parent=1 // pred_fallthru
      _
    // Predicated region
    $region30: #{tpu_custom_call.1} parent=1 // pred_check
      _
    $region31: #{tpu_custom_call.1} parent=1 // pred_check_branch
      %66 = sbr.rel (0) target = $region33
    $region32: #{tpu_custom_call.1} parent=1 // pred_region
      %68 = vsyncadd [#allocation9], 0
      %s69 = sshll.u32 %s7, 4
      %s70 = int_to_ptr.hbm [resolvable:$true] %s69
      %s71 = sshll.u32 [#allocation8], 4
      %s72 = int_to_ptr.vmem [resolvable:$true] %s71
      %77 = dma.hbm_to_vmem [thread:$0]  %s70, 512, %s72, [#allocation9], 128, 128, 8
    $region33: #{tpu_custom_call.1} parent=1 // pred_fallthru
      _
    // Predicated region
    $region34: #{tpu_custom_call.1} parent=1 // pred_check
      _
    $region35: #{tpu_custom_call.1} parent=1 // pred_check_branch
      %79 = sbr.rel (0) target = $region37
    $region36: #{tpu_custom_call.1} parent=1 // pred_region
      _
    $region37: #{tpu_custom_call.1} parent=1 // pred_fallthru
      _
    // Predicated region
    $region38: #{tpu_custom_call.1} parent=1 // pred_check
      _
    $region39: #{tpu_custom_call.1} parent=1 // pred_check_branch
      %81 = sbr.rel (0) target = $region41
    $region40: #{tpu_custom_call.1} parent=1 // pred_region
      %83 = dma.done [#allocation3], 512
    $region41: #{tpu_custom_call.1} parent=1 // pred_fallthru
      _
    // Predicated region
    $region42: #{tpu_custom_call.1} parent=1 // pred_check
      _
    $region43: #{tpu_custom_call.1} parent=1 // pred_check_branch
      %85 = sbr.rel (0) target = $region45
    $region44: #{tpu_custom_call.1} parent=1 // pred_region
      %87 = dma.done [#allocation6], 512
    $region45: #{tpu_custom_call.1} parent=1 // pred_fallthru
      _
    // Predicated region
    $region46: #{tpu_custom_call.1} parent=1 // pred_check
      _
    $region47: #{tpu_custom_call.1} parent=1 // pred_check_branch
      %89 = sbr.rel (0) target = $region49
    $region48: #{tpu_custom_call.1} parent=1 // pred_region
      %91 = dma.done [#allocation6], 512
    $region49: #{tpu_custom_call.1} parent=1 // pred_fallthru
      _
    // Predicated region
    $region50: #{tpu_custom_call.1} parent=1 // pred_check
      _
    $region51: #{tpu_custom_call.1} parent=1 // pred_check_branch
      %93 = sbr.rel (0) target = $region53
    $region52: #{tpu_custom_call.1} parent=1 // pred_region
      %95 = dma.done [#allocation9], 512
    $region53: #{tpu_custom_call.1} parent=1 // pred_fallthru
      _
    %v96 = vld [vmem:[%s0] sm:$0xff]
    %v97 = vld [vmem:[%s0 + $0x8] sm:$0xff]
    %v98 = vld [vmem:[%s1] sm:$0x3]
    %v99 = vld [vmem:[%s3] sm:$0x1]
    %v101 = vperm.slane %v99, 0
    %vm103 = vcmask 15360
    %v105 = vsel %vm103, %v96, 0
    %v108 = vsel %vm103, %v97, 0
    %vm110 = vcmask 1041408
    %v112 = vsel %vm110, %v98, 0
    %114 = vmatpush.msra.mxu0 0.0
    %115 = vmatpush.msra.mxu0 0.0
    %116 = vmatpush.msra.mxu0 0.0
    %117 = vmatpush.msra.mxu0 0.0
    %118 = vmatpush.msra.mxu0 0.0
    %119 = vmatpush.msra.mxu0 0.0
    %120 = vmatpush.msra.mxu0 0.0
    %121 = vmatpush.msra.mxu0 0.0
    %122 = vmatpush.msra.mxu0 0.0
    %123 = vmatpush.msra.mxu0 0.0
    %124 = vmatpush.msra.mxu0 0.0
    %125 = vmatpush.msra.mxu0 0.0
    %126 = vmatpush.msra.mxu0 0.0
    %127 = vmatpush.msra.mxu0 0.0
    %128 = vmatpush.msra.mxu0 0.0
    %129 = vmatpush.msra.mxu0 %v112
    %130 = vmatmul.f32.gmra.mxu0 %v105
    %v131 = vpop.f32.mrf.mxu0
    %v132 = vadd.f32 %v101, %v131
    %133 = vmatmul.f32.gmra.mxu0 %v108
    %v134 = vpop.f32.mrf.mxu0
    %v135 = vadd.f32 %v101, %v134
    %136 = vdwg.mxu0
    %v137 = vld [vmem:[#allocation2] sm:$0xff]
    %v138 = vld [vmem:[#allocation2 + $0x8] sm:$0xff]
    %v139 = vld [vmem:[#allocation2 + $0x10] sm:$0xff]
    %v140 = vld [vmem:[#allocation2 + $0x18] sm:$0xff]
    %vm141 = vcmask 261120
    %v143 = vsel %vm141, 0.0, 0
    %145 = vmatpush.msra.mxu0 0.0
    %146 = vmatpush.msra.mxu0 0.0
    %147 = vmatpush.msra.mxu0 0.0
    %148 = vmatpush.msra.mxu0 0.0
    %149 = vmatpush.msra.mxu0 0.0
    %150 = vmatpush.msra.mxu0 0.0
    %151 = vmatpush.msra.mxu0 0.0
    %152 = vmatpush.msra.mxu0 0.0
    %153 = vmatpush.msra.mxu0 0.0
    %154 = vmatpush.msra.mxu0 0.0
    %155 = vmatpush.msra.mxu0 0.0
    %156 = vmatpush.msra.mxu0 0.0
    %157 = vmatpush.msra.mxu0 %v140
    %158 = vmatpush.msra.mxu0 %v139
    %159 = vmatpush.msra.mxu0 %v138
    %160 = vmatpush.msra.mxu0 %v137
    %161 = vmatmul.f32.gmra.mxu0 %v143
    %v162 = vpop.f32.mrf.mxu0
    %v163 = vadd.f32 0.0, %v162
    %164 = vdwg.mxu0
    %v165 = vadd.f32 %v132, %v163
    %v166 = vxor.u32 %v165, 2147483648
    %v167 = vmul.f32 %v166, 1.442695
    %v168 = vpow.pop %v167
    %v169 = vadd.f32 %v168, 1.0
    %v170 = vrcp.pop %v169
    %v171 = vmul.f32 %v169, %v170
    %v172 = vsub.f32 1.0, %v171
    %v173 = vmul.f32 %v170, %v172
    %v174 = vadd.f32 %v170, %v173
    %vm175 = vweird.f32 %v169
    %vm176 = vweird.f32 %v170
    %vm177 = vmor %vm175, %vm176
    %v178 = vsel %vm177, %v170, %v174
    %v179 = vand.u32 2147483647, %v169
    %vm180 = vcmp.eq.f32.partialorder %v179, 8.507059e+37
    %v181 = vand.u32 %v169, 2147483648
    %v182 = vor.u32 1.1754944e-38, %v181
    %v183 = vsel %vm180, %v182, %v178
    %v184 = vmul.f32 1.0, %v183
    %v185 = vtanh.pop %v165
    %v186 = vmul.f32 %v184, 0.0
    %188 = vrot.lane.b32.xlu0 %v185, 64
    %v189 = vpop.permute.xlu0 %188
    %v191 = vmul.f32 %v184, %v189
    %193 = vrot.lane.b32.xlu0 %v191, 32
    %v194 = vpop.permute.xlu0 %193
    %v196 = vadd.f32 %v186, %v194
    %v197 = vtanh.pop %v196
    %199 = vrot.lane.b32.xlu0 %v197, 64
    %v200 = vpop.permute.xlu0 %199
    %v202 = vmul.f32 %v184, %v200
    %204 = vrot.lane.b32.xlu0 %v202, 32
    %v205 = vpop.permute.xlu0 %204
    %v206 = vsel %vm141, %v205, 0
    %208 = vmatpush.msra.mxu0 0.0
    %209 = vmatpush.msra.mxu0 0.0
    %210 = vmatpush.msra.mxu0 0.0
    %211 = vmatpush.msra.mxu0 0.0
    %212 = vmatpush.msra.mxu0 0.0
    %213 = vmatpush.msra.mxu0 0.0
    %214 = vmatpush.msra.mxu0 0.0
    %215 = vmatpush.msra.mxu0 0.0
    %216 = vmatpush.msra.mxu0 0.0
    %217 = vmatpush.msra.mxu0 0.0
    %218 = vmatpush.msra.mxu0 0.0
    %219 = vmatpush.msra.mxu0 0.0
    %220 = vmatpush.msra.mxu0 %v140
    %221 = vmatpush.msra.mxu0 %v139
    %222 = vmatpush.msra.mxu0 %v138
    %223 = vmatpush.msra.mxu0 %v137
    %224 = vmatmul.f32.gmra.mxu0 %v206
    %v225 = vpop.f32.mrf.mxu0
    %v226 = vadd.f32 0.0, %v225
    %227 = vdwg.mxu0
    %v229 = vrot.slane %v226, 6
    %v231 = vadd.f32 %v132, %v229
    %v232 = vxor.u32 %v231, 2147483648
    %v233 = vmul.f32 %v232, 1.442695
    %v234 = vpow.pop %v233
    %v235 = vadd.f32 %v234, 1.0
    %v236 = vrcp.pop %v235
    %v237 = vmul.f32 %v235, %v236
    %v238 = vsub.f32 1.0, %v237
    %v239 = vmul.f32 %v236, %v238
    %v240 = vadd.f32 %v236, %v239
    %vm241 = vweird.f32 %v235
    %vm242 = vweird.f32 %v236
    %vm243 = vmor %vm241, %vm242
    %v244 = vsel %vm243, %v236, %v240
    %v245 = vand.u32 2147483647, %v235
    %vm246 = vcmp.eq.f32.partialorder %v245, 8.507059e+37
    %v247 = vand.u32 %v235, 2147483648
    %v248 = vor.u32 1.1754944e-38, %v247
    %v249 = vsel %vm246, %v248, %v244
    %v250 = vmul.f32 1.0, %v249
    %v251 = vtanh.pop %v231
    %v253 = vrot.slane %v196, 6
    %v255 = vmul.f32 %v250, %v253
    %257 = vrot.lane.b32.xlu0 %v251, 64
    %v258 = vpop.permute.xlu0 %257
    %v260 = vmul.f32 %v250, %v258
    %262 = vrot.lane.b32.xlu0 %v260, 32
    %v263 = vpop.permute.xlu0 %262
    %v265 = vadd.f32 %v255, %v263
    %v266 = vtanh.pop %v265
    %268 = vrot.lane.b32.xlu0 %v266, 64
    %v269 = vpop.permute.xlu0 %268
    %v271 = vmul.f32 %v250, %v269
    %v273 = vrot.slane %v271, 2
    %274 = vrot.lane.b32.xlu0 %v273, 32
    %v275 = vpop.permute.xlu0 %274
    %v276 = vsel %vm141, %v275, 0
    %278 = vmatpush.msra.mxu0 0.0
    %279 = vmatpush.msra.mxu0 0.0
    %280 = vmatpush.msra.mxu0 0.0
    %281 = vmatpush.msra.mxu0 0.0
    %282 = vmatpush.msra.mxu0 0.0
    %283 = vmatpush.msra.mxu0 0.0
    %284 = vmatpush.msra.mxu0 0.0
    %285 = vmatpush.msra.mxu0 0.0
    %286 = vmatpush.msra.mxu0 0.0
    %287 = vmatpush.msra.mxu0 0.0
    %288 = vmatpush.msra.mxu0 0.0
    %289 = vmatpush.msra.mxu0 0.0
    %290 = vmatpush.msra.mxu0 %v140
    %291 = vmatpush.msra.mxu0 %v139
    %292 = vmatpush.msra.mxu0 %v138
    %293 = vmatpush.msra.mxu0 %v137
    %294 = vmatmul.f32.gmra.mxu0 %v276
    %v295 = vpop.f32.mrf.mxu0
    %v296 = vadd.f32 0.0, %v295
    %297 = vdwg.mxu0
    %v299 = vrot.slane %v296, 4
    %v301 = vadd.f32 %v132, %v299
    %v302 = vxor.u32 %v301, 2147483648
    %v303 = vmul.f32 %v302, 1.442695
    %v304 = vpow.pop %v303
    %v305 = vadd.f32 %v304, 1.0
    %v306 = vrcp.pop %v305
    %v307 = vmul.f32 %v305, %v306
    %v308 = vsub.f32 1.0, %v307
    %v309 = vmul.f32 %v306, %v308
    %v310 = vadd.f32 %v306, %v309
    %vm311 = vweird.f32 %v305
    %vm312 = vweird.f32 %v306
    %vm313 = vmor %vm311, %vm312
    %v314 = vsel %vm313, %v306, %v310
    %v315 = vand.u32 2147483647, %v305
    %vm316 = vcmp.eq.f32.partialorder %v315, 8.507059e+37
    %v317 = vand.u32 %v305, 2147483648
    %v318 = vor.u32 1.1754944e-38, %v317
    %v319 = vsel %vm316, %v318, %v314
    %v320 = vmul.f32 1.0, %v319
    %v321 = vtanh.pop %v301
    %v323 = vrot.slane %v265, 6
    %v325 = vmul.f32 %v320, %v323
    %327 = vrot.lane.b32.xlu0 %v321, 64
    %v328 = vpop.permute.xlu0 %327
    %v330 = vmul.f32 %v320, %v328
    %332 = vrot.lane.b32.xlu0 %v330, 32
    %v333 = vpop.permute.xlu0 %332
    %v335 = vadd.f32 %v325, %v333
    %v336 = vtanh.pop %v335
    %338 = vrot.lane.b32.xlu0 %v336, 64
    %v339 = vpop.permute.xlu0 %338
    %v341 = vmul.f32 %v320, %v339
    %v343 = vrot.slane %v341, 4
    %344 = vrot.lane.b32.xlu0 %v343, 32
    %v345 = vpop.permute.xlu0 %344
    %v346 = vsel %vm141, %v345, 0
    %348 = vmatpush.msra.mxu0 0.0
    %349 = vmatpush.msra.mxu0 0.0
    %350 = vmatpush.msra.mxu0 0.0
    %351 = vmatpush.msra.mxu0 0.0
    %352 = vmatpush.msra.mxu0 0.0
    %353 = vmatpush.msra.mxu0 0.0
    %354 = vmatpush.msra.mxu0 0.0
    %355 = vmatpush.msra.mxu0 0.0
    %356 = vmatpush.msra.mxu0 0.0
    %357 = vmatpush.msra.mxu0 0.0
    %358 = vmatpush.msra.mxu0 0.0
    %359 = vmatpush.msra.mxu0 0.0
    %360 = vmatpush.msra.mxu0 %v140
    %361 = vmatpush.msra.mxu0 %v139
    %362 = vmatpush.msra.mxu0 %v138
    %363 = vmatpush.msra.mxu0 %v137
    %364 = vmatmul.f32.gmra.mxu0 %v346
    %v365 = vpop.f32.mrf.mxu0
    %v366 = vadd.f32 0.0, %v365
    %367 = vdwg.mxu0
    %v369 = vrot.slane %v366, 2
    %v371 = vadd.f32 %v132, %v369
    %v372 = vxor.u32 %v371, 2147483648
    %v373 = vmul.f32 %v372, 1.442695
    %v374 = vpow.pop %v373
    %v375 = vadd.f32 %v374, 1.0
    %v376 = vrcp.pop %v375
    %v377 = vmul.f32 %v375, %v376
    %v378 = vsub.f32 1.0, %v377
    %v379 = vmul.f32 %v376, %v378
    %v380 = vadd.f32 %v376, %v379
    %vm381 = vweird.f32 %v375
    %vm382 = vweird.f32 %v376
    %vm383 = vmor %vm381, %vm382
    %v384 = vsel %vm383, %v376, %v380
    %v385 = vand.u32 2147483647, %v375
    %vm386 = vcmp.eq.f32.partialorder %v385, 8.507059e+37
    %v387 = vand.u32 %v375, 2147483648
    %v388 = vor.u32 1.1754944e-38, %v387
    %v389 = vsel %vm386, %v388, %v384
    %v390 = vmul.f32 1.0, %v389
    %v391 = vtanh.pop %v371
    %v393 = vrot.slane %v335, 6
    %v395 = vmul.f32 %v390, %v393
    %397 = vrot.lane.b32.xlu0 %v391, 64
    %v398 = vpop.permute.xlu0 %397
    %v400 = vmul.f32 %v390, %v398
    %402 = vrot.lane.b32.xlu0 %v400, 32
    %v403 = vpop.permute.xlu0 %402
    %v405 = vadd.f32 %v395, %v403
    %v406 = vtanh.pop %v405
    %408 = vrot.lane.b32.xlu0 %v406, 64
    %v409 = vpop.permute.xlu0 %408
    %v411 = vmul.f32 %v390, %v409
    %v413 = vrot.slane %v411, 6
    %414 = vrot.lane.b32.xlu0 %v413, 32
    %v415 = vpop.permute.xlu0 %414
    %v416 = vsel %vm141, %v415, 0
    %418 = vmatpush.msra.mxu0 0.0
    %419 = vmatpush.msra.mxu0 0.0
    %420 = vmatpush.msra.mxu0 0.0
    %421 = vmatpush.msra.mxu0 0.0
    %422 = vmatpush.msra.mxu0 0.0
    %423 = vmatpush.msra.mxu0 0.0
    %424 = vmatpush.msra.mxu0 0.0
    %425 = vmatpush.msra.mxu0 0.0
    %426 = vmatpush.msra.mxu0 0.0
    %427 = vmatpush.msra.mxu0 0.0
    %428 = vmatpush.msra.mxu0 0.0
    %429 = vmatpush.msra.mxu0 0.0
    %430 = vmatpush.msra.mxu0 %v140
    %431 = vmatpush.msra.mxu0 %v139
    %432 = vmatpush.msra.mxu0 %v138
    %433 = vmatpush.msra.mxu0 %v137
    %434 = vmatmul.f32.gmra.mxu0 %v416
    %v435 = vpop.f32.mrf.mxu0
    %v436 = vadd.f32 0.0, %v435
    %437 = vdwg.mxu0
    %v438 = vadd.f32 %v135, %v436
    %v439 = vxor.u32 %v438, 2147483648
    %v440 = vmul.f32 %v439, 1.442695
    %v441 = vpow.pop %v440
    %v442 = vadd.f32 %v441, 1.0
    %v443 = vrcp.pop %v442
    %v444 = vmul.f32 %v442, %v443
    %v445 = vsub.f32 1.0, %v444
    %v446 = vmul.f32 %v443, %v445
    %v447 = vadd.f32 %v443, %v446
    %vm448 = vweird.f32 %v442
    %vm449 = vweird.f32 %v443
    %vm450 = vmor %vm448, %vm449
    %v451 = vsel %vm450, %v443, %v447
    %v452 = vand.u32 2147483647, %v442
    %vm453 = vcmp.eq.f32.partialorder %v452, 8.507059e+37
    %v454 = vand.u32 %v442, 2147483648
    %v455 = vor.u32 1.1754944e-38, %v454
    %v456 = vsel %vm453, %v455, %v451
    %v457 = vmul.f32 1.0, %v456
    %v458 = vtanh.pop %v438
    %v460 = vrot.slane %v405, 6
    %v462 = vmul.f32 %v457, %v460
    %464 = vrot.lane.b32.xlu0 %v458, 64
    %v465 = vpop.permute.xlu0 %464
    %v467 = vmul.f32 %v457, %v465
    %469 = vrot.lane.b32.xlu0 %v467, 32
    %v470 = vpop.permute.xlu0 %469
    %v472 = vadd.f32 %v462, %v470
    %v473 = vtanh.pop %v472
    %475 = vrot.lane.b32.xlu0 %v473, 64
    %v476 = vpop.permute.xlu0 %475
    %v478 = vmul.f32 %v457, %v476
    %480 = vrot.lane.b32.xlu0 %v478, 32
    %v481 = vpop.permute.xlu0 %480
    %v482 = vsel %vm141, %v481, 0
    %484 = vmatpush.msra.mxu0 0.0
    %485 = vmatpush.msra.mxu0 0.0
    %486 = vmatpush.msra.mxu0 0.0
    %487 = vmatpush.msra.mxu0 0.0
    %488 = vmatpush.msra.mxu0 0.0
    %489 = vmatpush.msra.mxu0 0.0
    %490 = vmatpush.msra.mxu0 0.0
    %491 = vmatpush.msra.mxu0 0.0
    %492 = vmatpush.msra.mxu0 0.0
    %493 = vmatpush.msra.mxu0 0.0
    %494 = vmatpush.msra.mxu0 0.0
    %495 = vmatpush.msra.mxu0 0.0
    %496 = vmatpush.msra.mxu0 %v140
    %497 = vmatpush.msra.mxu0 %v139
    %498 = vmatpush.msra.mxu0 %v138
    %499 = vmatpush.msra.mxu0 %v137
    %500 = vmatmul.f32.gmra.mxu0 %v482
    %v501 = vpop.f32.mrf.mxu0
    %v502 = vadd.f32 0.0, %v501
    %503 = vdwg.mxu0
    %v505 = vrot.slane %v502, 6
    %v507 = vadd.f32 %v135, %v505
    %v508 = vxor.u32 %v507, 2147483648
    %v509 = vmul.f32 %v508, 1.442695
    %v510 = vpow.pop %v509
    %v511 = vadd.f32 %v510, 1.0
    %v512 = vrcp.pop %v511
    %v513 = vmul.f32 %v511, %v512
    %v514 = vsub.f32 1.0, %v513
    %v515 = vmul.f32 %v512, %v514
    %v516 = vadd.f32 %v512, %v515
    %vm517 = vweird.f32 %v511
    %vm518 = vweird.f32 %v512
    %vm519 = vmor %vm517, %vm518
    %v520 = vsel %vm519, %v512, %v516
    %v521 = vand.u32 2147483647, %v511
    %vm522 = vcmp.eq.f32.partialorder %v521, 8.507059e+37
    %v523 = vand.u32 %v511, 2147483648
    %v524 = vor.u32 1.1754944e-38, %v523
    %v525 = vsel %vm522, %v524, %v520
    %v526 = vmul.f32 1.0, %v525
    %v527 = vtanh.pop %v507
    %v529 = vrot.slane %v472, 6
    %v531 = vmul.f32 %v526, %v529
    %533 = vrot.lane.b32.xlu0 %v527, 64
    %v534 = vpop.permute.xlu0 %533
    %v536 = vmul.f32 %v526, %v534
    %538 = vrot.lane.b32.xlu0 %v536, 32
    %v539 = vpop.permute.xlu0 %538
    %v541 = vadd.f32 %v531, %v539
    %v542 = vtanh.pop %v541
    %544 = vrot.lane.b32.xlu0 %v542, 64
    %v545 = vpop.permute.xlu0 %544
    %v547 = vmul.f32 %v526, %v545
    %v549 = vrot.slane %v547, 2
    %550 = vrot.lane.b32.xlu0 %v549, 32
    %v551 = vpop.permute.xlu0 %550
    %v552 = vsel %vm141, %v551, 0
    %554 = vmatpush.msra.mxu0 0.0
    %555 = vmatpush.msra.mxu0 0.0
    %556 = vmatpush.msra.mxu0 0.0
    %557 = vmatpush.msra.mxu0 0.0
    %558 = vmatpush.msra.mxu0 0.0
    %559 = vmatpush.msra.mxu0 0.0
    %560 = vmatpush.msra.mxu0 0.0
    %561 = vmatpush.msra.mxu0 0.0
    %562 = vmatpush.msra.mxu0 0.0
    %563 = vmatpush.msra.mxu0 0.0
    %564 = vmatpush.msra.mxu0 0.0
    %565 = vmatpush.msra.mxu0 0.0
    %566 = vmatpush.msra.mxu0 %v140
    %567 = vmatpush.msra.mxu0 %v139
    %568 = vmatpush.msra.mxu0 %v138
    %569 = vmatpush.msra.mxu0 %v137
    %570 = vmatmul.f32.gmra.mxu0 %v552
    %v571 = vpop.f32.mrf.mxu0
    %v572 = vadd.f32 0.0, %v571
    %573 = vdwg.mxu0
    %v575 = vrot.slane %v572, 4
    %v577 = vadd.f32 %v135, %v575
    %v578 = vxor.u32 %v577, 2147483648
    %v579 = vmul.f32 %v578, 1.442695
    %v580 = vpow.pop %v579
    %v581 = vadd.f32 %v580, 1.0
    %v582 = vrcp.pop %v581
    %v583 = vmul.f32 %v581, %v582
    %v584 = vsub.f32 1.0, %v583
    %v585 = vmul.f32 %v582, %v584
    %v586 = vadd.f32 %v582, %v585
    %vm587 = vweird.f32 %v581
    %vm588 = vweird.f32 %v582
    %vm589 = vmor %vm587, %vm588
    %v590 = vsel %vm589, %v582, %v586
    %v591 = vand.u32 2147483647, %v581
    %vm592 = vcmp.eq.f32.partialorder %v591, 8.507059e+37
    %v593 = vand.u32 %v581, 2147483648
    %v594 = vor.u32 1.1754944e-38, %v593
    %v595 = vsel %vm592, %v594, %v590
    %v596 = vmul.f32 1.0, %v595
    %v597 = vtanh.pop %v577
    %v599 = vrot.slane %v541, 6
    %v601 = vmul.f32 %v596, %v599
    %603 = vrot.lane.b32.xlu0 %v597, 64
    %v604 = vpop.permute.xlu0 %603
    %v606 = vmul.f32 %v596, %v604
    %608 = vrot.lane.b32.xlu0 %v606, 32
    %v609 = vpop.permute.xlu0 %608
    %v611 = vadd.f32 %v601, %v609
    %v612 = vtanh.pop %v611
    %614 = vrot.lane.b32.xlu0 %v612, 64
    %v615 = vpop.permute.xlu0 %614
    %v617 = vmul.f32 %v596, %v615
    %v619 = vrot.slane %v617, 4
    %620 = vrot.lane.b32.xlu0 %v619, 32
    %v621 = vpop.permute.xlu0 %620
    %v622 = vsel %vm141, %v621, 0
    %624 = vmatpush.msra.mxu0 0.0
    %625 = vmatpush.msra.mxu0 0.0
    %626 = vmatpush.msra.mxu0 0.0
    %627 = vmatpush.msra.mxu0 0.0
    %628 = vmatpush.msra.mxu0 0.0
    %629 = vmatpush.msra.mxu0 0.0
    %630 = vmatpush.msra.mxu0 0.0
    %631 = vmatpush.msra.mxu0 0.0
    %632 = vmatpush.msra.mxu0 0.0
    %633 = vmatpush.msra.mxu0 0.0
    %634 = vmatpush.msra.mxu0 0.0
    %635 = vmatpush.msra.mxu0 0.0
    %636 = vmatpush.msra.mxu0 %v140
    %637 = vmatpush.msra.mxu0 %v139
    %638 = vmatpush.msra.mxu0 %v138
    %639 = vmatpush.msra.mxu0 %v137
    %640 = vmatmul.f32.gmra.mxu0 %v622
    %v641 = vpop.f32.mrf.mxu0
    %v642 = vadd.f32 0.0, %v641
    %643 = vdwg.mxu0
    %v645 = vrot.slane %v642, 2
    %v647 = vadd.f32 %v135, %v645
    %v648 = vxor.u32 %v647, 2147483648
    %v649 = vmul.f32 %v648, 1.442695
    %v650 = vpow.pop %v649
    %v651 = vadd.f32 %v650, 1.0
    %v652 = vrcp.pop %v651
    %v653 = vmul.f32 %v651, %v652
    %v654 = vsub.f32 1.0, %v653
    %v655 = vmul.f32 %v652, %v654
    %v656 = vadd.f32 %v652, %v655
    %vm657 = vweird.f32 %v651
    %vm658 = vweird.f32 %v652
    %vm659 = vmor %vm657, %vm658
    %v660 = vsel %vm659, %v652, %v656
    %v661 = vand.u32 2147483647, %v651
    %vm662 = vcmp.eq.f32.partialorder %v661, 8.507059e+37
    %v663 = vand.u32 %v651, 2147483648
    %v664 = vor.u32 1.1754944e-38, %v663
    %v665 = vsel %vm662, %v664, %v660
    %v666 = vmul.f32 1.0, %v665
    %v667 = vtanh.pop %v647
    %v669 = vrot.slane %v611, 6
    %v671 = vmul.f32 %v666, %v669
    %673 = vrot.lane.b32.xlu0 %v667, 64
    %v674 = vpop.permute.xlu0 %673
    %v676 = vmul.f32 %v666, %v674
    %678 = vrot.lane.b32.xlu0 %v676, 32
    %v679 = vpop.permute.xlu0 %678
    %v681 = vadd.f32 %v671, %v679
    %v682 = vtanh.pop %v681
    %684 = vrot.lane.b32.xlu0 %v682, 64
    %v685 = vpop.permute.xlu0 %684
    %v687 = vmul.f32 %v666, %v685
    %v688 = vld [vmem:[#allocation5] sm:$0xff]
    %v689 = vld [vmem:[#allocation5 + $0x8] sm:$0xff]
    %v690 = vld [vmem:[#allocation5 + $0x10] sm:$0xff]
    %v691 = vld [vmem:[#allocation5 + $0x18] sm:$0xff]
    %v692 = vld [vmem:[%s5] sm:$0x1]
    %v694 = vperm.slane %v692, 0
    %v697 = vrot.slane %v687, 6
    %698 = vrot.lane.b32.xlu0 %v697, 32
    %v699 = vpop.permute.xlu0 %698
    %v700 = vsel %vm141, %v699, 0
    %702 = vmatpush.msra.mxu0 0.0
    %703 = vmatpush.msra.mxu0 0.0
    %704 = vmatpush.msra.mxu0 0.0
    %705 = vmatpush.msra.mxu0 0.0
    %706 = vmatpush.msra.mxu0 0.0
    %707 = vmatpush.msra.mxu0 0.0
    %708 = vmatpush.msra.mxu0 0.0
    %709 = vmatpush.msra.mxu0 0.0
    %710 = vmatpush.msra.mxu0 0.0
    %711 = vmatpush.msra.mxu0 0.0
    %712 = vmatpush.msra.mxu0 0.0
    %713 = vmatpush.msra.mxu0 0.0
    %714 = vmatpush.msra.mxu0 %v691
    %715 = vmatpush.msra.mxu0 %v690
    %716 = vmatpush.msra.mxu0 %v689
    %717 = vmatpush.msra.mxu0 %v688
    %718 = vmatmul.f32.gmra.mxu0 %v700
    %v719 = vpop.f32.mrf.mxu0
    %v720 = vadd.f32 %v694, %v719
    %721 = vdwg.mxu0
    %v722 = vtanh.pop %v720
    %v723 = vld [vmem:[#allocation7] sm:$0xff]
    %v724 = vld [vmem:[#allocation7 + $0x8] sm:$0xff]
    %v725 = vld [vmem:[#allocation7 + $0x10] sm:$0xff]
    %v726 = vld [vmem:[#allocation7 + $0x18] sm:$0xff]
    %v727 = vld [vmem:[#allocation8] sm:$0xff]
    %v728 = vld [vmem:[#allocation8 + $0x8] sm:$0xff]
    %v729 = vld [vmem:[#allocation8 + $0x10] sm:$0xff]
    %v730 = vld [vmem:[#allocation8 + $0x18] sm:$0xff]
    %v732 = vsel %vm141, %v722, 0
    %734 = vmatpush.msra.mxu0 0.0
    %735 = vmatpush.msra.mxu0 0.0
    %736 = vmatpush.msra.mxu0 0.0
    %737 = vmatpush.msra.mxu0 0.0
    %738 = vmatpush.msra.mxu0 0.0
    %739 = vmatpush.msra.mxu0 0.0
    %740 = vmatpush.msra.mxu0 0.0
    %741 = vmatpush.msra.mxu0 0.0
    %742 = vmatpush.msra.mxu0 0.0
    %743 = vmatpush.msra.mxu0 0.0
    %744 = vmatpush.msra.mxu0 0.0
    %745 = vmatpush.msra.mxu0 0.0
    %746 = vmatpush.msra.mxu0 %v730
    %747 = vmatpush.msra.mxu0 %v729
    %748 = vmatpush.msra.mxu0 %v728
    %749 = vmatpush.msra.mxu0 %v727
    %750 = vmatmul.f32.gmra.mxu0 %v732
    %v751 = vpop.f32.mrf.mxu0
    %v752 = vadd.f32 0.0, %v751
    %753 = vdwg.mxu0
    %754 = vmatpush.msra.mxu0 0.0
    %755 = vmatpush.msra.mxu0 0.0
    %756 = vmatpush.msra.mxu0 0.0
    %757 = vmatpush.msra.mxu0 0.0
    %758 = vmatpush.msra.mxu0 0.0
    %759 = vmatpush.msra.mxu0 0.0
    %760 = vmatpush.msra.mxu0 0.0
    %761 = vmatpush.msra.mxu0 0.0
    %762 = vmatpush.msra.mxu0 0.0
    %763 = vmatpush.msra.mxu0 0.0
    %764 = vmatpush.msra.mxu0 0.0
    %765 = vmatpush.msra.mxu0 0.0
    %766 = vmatpush.msra.mxu0 %v726
    %767 = vmatpush.msra.mxu0 %v725
    %768 = vmatpush.msra.mxu0 %v724
    %769 = vmatpush.msra.mxu0 %v723
    %770 = vmatmul.f32.gmra.mxu0 %v700
    %v771 = vpop.f32.mrf.mxu0
    %v772 = vadd.f32 %v752, %v771
    %773 = vdwg.mxu0
    %v774 = vld [vmem:[%s8] sm:$0x1]
    %v776 = vperm.slane %v774, 0
    %v778 = vadd.f32 %v772, %v776
    %779 = vst [vmem:[#allocation10] sm:$0x3] %v778
    // Predicated region
    $region54: #{tpu_custom_call.1} parent=1 // pred_check
      _
    $region55: #{tpu_custom_call.1} parent=1 // pred_check_branch
      %781 = sbr.rel (0) target = $region57
    $region56: #{tpu_custom_call.1} parent=1 // pred_region
      %783 = vsyncadd [#allocation4], 0
      %s785 = sshll.u32 [#allocation10], 4
      %s786 = int_to_ptr.vmem [resolvable:$true] %s785
      %s787 = sshll.u32 %s9, 4
      %s788 = int_to_ptr.hbm [resolvable:$true] %s787
      %790 = dma.vmem_to_hbm [thread:$0]  %s786, 32, %s788, [#allocation4]
    $region57: #{tpu_custom_call.1} parent=1 // pred_fallthru
      _
    // Predicated region
    $region58: #{tpu_custom_call.1} parent=1 // pred_check
      _
    $region59: #{tpu_custom_call.1} parent=1 // pred_check_branch
      %792 = sbr.rel (0) target = $region61
    $region60: #{tpu_custom_call.1} parent=1 // pred_region
      %794 = dma.done [#allocation4], 32
    $region61: #{tpu_custom_call.1} parent=1 // pred_fallthru
      _
    %795 = vsyncpa [#allocation3], 1
    %796 = vsyncpa [#allocation6], 1
    %797 = vsyncpa [#allocation9], 1
    %798 = vsyncpa [#allocation4], 1

</llo_original>
